<compile_context>
chip_gen: v5e
topology: v5e:2x2
jax: 0.10.0
libtpu: 0.0.40
codegen_flags: <defaults>
</compile_context>

<pallas_src>
import jax
import jax.numpy as jnp
from jax.experimental import pallas as pl
from jax.experimental.pallas import tpu as pltpu


def _round_up(n, m):
    return ((n + m - 1) // m) * m


def qnet_kernel(x_ref, w1_ref, b1_ref, w2_ref, b2_ref, w3_ref, b3_ref, o_ref):
    x = x_ref[...]          # (TILE_B, 4)  float32
    w1 = w1_ref[...]        # (4, 64)

    # fc1: K=4 -> 4 VPU broadcast-FMAs (MXU would be ~3% utilized at K=4).
    h1 = b1_ref[...] + x[:, 0:1] * w1[0:1, :]
    h1 = h1 + x[:, 1:2] * w1[1:2, :]
    h1 = h1 + x[:, 2:3] * w1[2:3, :]
    h1 = h1 + x[:, 3:4] * w1[3:4, :]
    h1 = jnp.maximum(h1, 0.0)                         # (TILE_B, 64)

    # fc2: 64x32 on the MXU with f32 accumulation.
    h2 = jnp.dot(h1, w2_ref[...], preferred_element_type=jnp.float32) + b2_ref[...]
    h2 = jnp.maximum(h2, 0.0)                         # (TILE_B, 32)

    # fc3: 32x4. Output tile is only 4 lanes wide so the HBM writeback is
    # 16 B/row instead of 512 B/row (the kernel is writeback-bound, not
    # store-slot-bound, so the masked vst is the right trade).
    o_ref[...] = (
        jnp.dot(h2, w3_ref[...], preferred_element_type=jnp.float32) + b3_ref[...]
    )                                                 # (TILE_B, 4)


def _choose_tile_b(B, tile_b):
    # Sublane-aligned tile, capped at tile_b, and (when B allows) small enough
    # that the grid has >= 2 steps so both TensorCores get work on v7x.
    half = _round_up(max((B + 1) // 2, 8), 8)
    return max(8, min(tile_b, half))


def qnet_forward(x, params, tile_b=4096):
    """x: (B, 4) float32 -> (B, 4) float32 Q-values."""
    w1, b1, w2, b2, w3, b3 = params
    B = x.shape[0]

    TILE_B = _choose_tile_b(B, tile_b)
    B_pad = _round_up(B, TILE_B)
    if B_pad != B:
        # TODO(synk): could drop this pad by masking the tail tile in-kernel;
        # it is a minor extra read/write pass over x.
        x = jnp.pad(x, ((0, B_pad - B), (0, 0)))

    grid = (B_pad // TILE_B,)

    # Every <=128-lane-wide f32 tile lane-pads to 128 lanes in VMEM, i.e.
    # TILE_B * 512 B per tile. Budget ~8 such tiles (x/out double-buffered +
    # h1/h2 temporaries + margin); clamp to a safe cross-generation range
    # (>= v5e's needs, well under v7x's 64 MiB physical VMEM).
    tile_vmem = TILE_B * 128 * 4
    vmem_limit = min(48 * 1024 * 1024, max(16 * 1024 * 1024, 8 * tile_vmem))

    out = pl.pallas_call(
        qnet_kernel,
        out_shape=jax.ShapeDtypeStruct((B_pad, 4), jnp.float32),
        grid=grid,
        in_specs=[
            pl.BlockSpec((TILE_B, 4), lambda i: (i, 0)),   # x: streamed per tile
            pl.BlockSpec((4, 64), lambda i: (0, 0)),       # w1: VMEM-resident
            pl.BlockSpec((1, 64), lambda i: (0, 0)),       # b1
            pl.BlockSpec((64, 32), lambda i: (0, 0)),      # w2
            pl.BlockSpec((1, 32), lambda i: (0, 0)),       # b2
            pl.BlockSpec((32, 4), lambda i: (0, 0)),       # w3
            pl.BlockSpec((1, 4), lambda i: (0, 0)),        # b3
        ],
        out_specs=pl.BlockSpec((TILE_B, 4), lambda i: (i, 0)),
        compiler_params=pltpu.CompilerParams(
            dimension_semantics=("parallel",),             # v7x: 2 TCs on batch
            vmem_limit_bytes=vmem_limit,
        ),
    )(x, w1, b1, w2, b2, w3, b3)

    return out[:B]


def init_qnet_params(key):
    """Deterministic synthetic init matching Qnet's shapes.

    fc1: Linear(4, 64)   -> w1 (4, 64),  b1 (1, 64)
    fc2: Linear(64, 32)  -> w2 (64, 32), b2 (1, 32)
    fc3: Linear(32, 4)   -> w3 (32, 4),  b3 (1, 4)
    (weights stored as (in, out); biases kept 2-D for TPU-friendly layout)
    """
    k1, k2, k3, k4, k5, k6 = jax.random.split(key, 6)

    def u(k, shape, fan_in):
        bound = 1.0 / jnp.sqrt(fan_in)
        return jax.random.uniform(k, shape, jnp.float32, -bound, bound)

    w1 = u(k1, (4, 64), 4.0)
    b1 = u(k2, (1, 64), 4.0)
    w2 = u(k3, (64, 32), 64.0)
    b2 = u(k4, (1, 32), 64.0)
    w3 = u(k5, (32, 4), 32.0)
    b3 = u(k6, (1, 4), 32.0)
    return (w1, b1, w2, b2, w3, b3)


def qnet_reference(x, params):
    w1, b1, w2, b2, w3, b3 = params
    h1 = jnp.maximum(x @ w1 + b1, 0.0)
    h2 = jnp.maximum(h1 @ w2 + b2, 0.0)
    return h2 @ w3 + b3


if __name__ == "__main__":
    key = jax.random.PRNGKey(0)
    k_params, k_x1, k_x2 = jax.random.split(key, 3)
    params = init_qnet_params(k_params)

    # Case 1: tiny batch of CartPole-like observations (B, 4).
    B1 = 8
    x1 = jax.random.normal(k_x1, (B1, 4), dtype=jnp.float32)
    out1 = jax.block_until_ready(qnet_forward(x1, params))
    ref1 = qnet_reference(x1, params)
    assert out1.shape == (B1, 4)
    assert jnp.allclose(out1, ref1, atol=1e-5, rtol=1e-5), "mismatch vs reference (B=8)"

    # Case 2: batch not divisible by the tile size (exercises padding + grid,
    # and a multi-step grid for megacore sharding).
    B2 = 300
    x2 = jax.random.normal(k_x2, (B2, 4), dtype=jnp.float32)
    out2 = jax.block_until_ready(qnet_forward(x2, params, tile_b=128))
    ref2 = qnet_reference(x2, params)
    assert out2.shape == (B2, 4)
    assert jnp.allclose(out2, ref2, atol=1e-5, rtol=1e-5), "mismatch vs reference (B=300)"

    print("KERNEL_OK")
</pallas_src>

<mosaic_0001>
module attributes {stable_mosaic.version = 11 : i64} {
  func.func @qnet_kernel(%arg0: i32, %arg1: memref<8x4xf32, #tpu.memory_space<vmem>>, %arg2: memref<4x64xf32, #tpu.memory_space<vmem>>, %arg3: memref<1x64xf32, #tpu.memory_space<vmem>>, %arg4: memref<64x32xf32, #tpu.memory_space<vmem>>, %arg5: memref<1x32xf32, #tpu.memory_space<vmem>>, %arg6: memref<32x4xf32, #tpu.memory_space<vmem>>, %arg7: memref<1x4xf32, #tpu.memory_space<vmem>>, %arg8: memref<8x4xf32, #tpu.memory_space<vmem>>) attributes {dimension_semantics = [#tpu.dimension_semantics<parallel>], iteration_bounds = array<i64: 1>, scalar_prefetch = 0 : i64, scratch_operands = 0 : i64, tpu.core_type = #tpu.core_type<tc>, window_params = [{transform_indices = @transform_0, window_bounds = array<i64: 8, 4>}, {pipeline_mode = #tpu.pipeline_mode<synchronous>, transform_indices = @transform_1, window_bounds = array<i64: 4, 64>}, {pipeline_mode = #tpu.pipeline_mode<synchronous>, transform_indices = @transform_2, window_bounds = array<i64: 1, 64>}, {pipeline_mode = #tpu.pipeline_mode<synchronous>, transform_indices = @transform_3, window_bounds = array<i64: 64, 32>}, {pipeline_mode = #tpu.pipeline_mode<synchronous>, transform_indices = @transform_4, window_bounds = array<i64: 1, 32>}, {pipeline_mode = #tpu.pipeline_mode<synchronous>, transform_indices = @transform_5, window_bounds = array<i64: 32, 4>}, {pipeline_mode = #tpu.pipeline_mode<synchronous>, transform_indices = @transform_6, window_bounds = array<i64: 1, 4>}, {transform_indices = @transform_7, window_bounds = array<i64: 8, 4>}]} {
    %c0 = arith.constant 0 : index
    %c0_0 = arith.constant 0 : index
    %0 = vector.load %arg1[%c0, %c0_0] : memref<8x4xf32, #tpu.memory_space<vmem>>, vector<8x4xf32>
    %c0_1 = arith.constant 0 : index
    %c0_2 = arith.constant 0 : index
    %1 = vector.load %arg2[%c0_1, %c0_2] : memref<4x64xf32, #tpu.memory_space<vmem>>, vector<4x64xf32>
    %c0_3 = arith.constant 0 : index
    %c0_4 = arith.constant 0 : index
    %2 = vector.load %arg3[%c0_3, %c0_4] : memref<1x64xf32, #tpu.memory_space<vmem>>, vector<1x64xf32>
    %3 = vector.extract_strided_slice %0 {offsets = [0, 0], sizes = [8, 1], strides = [1, 1]} : vector<8x4xf32> to vector<8x1xf32>
    %4 = vector.extract_strided_slice %1 {offsets = [0, 0], sizes = [1, 64], strides = [1, 1]} : vector<4x64xf32> to vector<1x64xf32>
    %5 = vector.broadcast %3 : vector<8x1xf32> to vector<8x64xf32>
    %6 = vector.broadcast %4 : vector<1x64xf32> to vector<8x64xf32>
    %7 = arith.mulf %5, %6 : vector<8x64xf32>
    %8 = vector.broadcast %2 : vector<1x64xf32> to vector<8x64xf32>
    %9 = arith.addf %8, %7 : vector<8x64xf32>
    %10 = vector.extract_strided_slice %0 {offsets = [0, 1], sizes = [8, 1], strides = [1, 1]} : vector<8x4xf32> to vector<8x1xf32>
    %11 = vector.extract_strided_slice %1 {offsets = [1, 0], sizes = [1, 64], strides = [1, 1]} : vector<4x64xf32> to vector<1x64xf32>
    %12 = vector.broadcast %10 : vector<8x1xf32> to vector<8x64xf32>
    %13 = vector.broadcast %11 : vector<1x64xf32> to vector<8x64xf32>
    %14 = arith.mulf %12, %13 : vector<8x64xf32>
    %15 = arith.addf %9, %14 : vector<8x64xf32>
    %16 = vector.extract_strided_slice %0 {offsets = [0, 2], sizes = [8, 1], strides = [1, 1]} : vector<8x4xf32> to vector<8x1xf32>
    %17 = vector.extract_strided_slice %1 {offsets = [2, 0], sizes = [1, 64], strides = [1, 1]} : vector<4x64xf32> to vector<1x64xf32>
    %18 = vector.broadcast %16 : vector<8x1xf32> to vector<8x64xf32>
    %19 = vector.broadcast %17 : vector<1x64xf32> to vector<8x64xf32>
    %20 = arith.mulf %18, %19 : vector<8x64xf32>
    %21 = arith.addf %15, %20 : vector<8x64xf32>
    %22 = vector.extract_strided_slice %0 {offsets = [0, 3], sizes = [8, 1], strides = [1, 1]} : vector<8x4xf32> to vector<8x1xf32>
    %23 = vector.extract_strided_slice %1 {offsets = [3, 0], sizes = [1, 64], strides = [1, 1]} : vector<4x64xf32> to vector<1x64xf32>
    %24 = vector.broadcast %22 : vector<8x1xf32> to vector<8x64xf32>
    %25 = vector.broadcast %23 : vector<1x64xf32> to vector<8x64xf32>
    %26 = arith.mulf %24, %25 : vector<8x64xf32>
    %27 = arith.addf %21, %26 : vector<8x64xf32>
    %cst = arith.constant 0.000000e+00 : f32
    %28 = vector.broadcast %cst : f32 to vector<8x64xf32>
    %29 = arith.maximumf %27, %28 : vector<8x64xf32>
    %c0_5 = arith.constant 0 : index
    %c0_6 = arith.constant 0 : index
    %30 = vector.load %arg4[%c0_5, %c0_6] : memref<64x32xf32, #tpu.memory_space<vmem>>, vector<64x32xf32>
    %cst_7 = arith.constant dense<0.000000e+00> : vector<8x32xf32>
    %31 = tpu.matmul %29, %30, %cst_7 {dimension_numbers = #tpu.dot_dimension_numbers<[1], [0], [0], [1], [0, 0, 1, 1], [], []>} : vector<8x64xf32>, vector<64x32xf32>, vector<8x32xf32> -> vector<8x32xf32>
    %c0_8 = arith.constant 0 : index
    %c0_9 = arith.constant 0 : index
    %32 = vector.load %arg5[%c0_8, %c0_9] : memref<1x32xf32, #tpu.memory_space<vmem>>, vector<1x32xf32>
    %33 = vector.broadcast %32 : vector<1x32xf32> to vector<8x32xf32>
    %34 = arith.addf %31, %33 : vector<8x32xf32>
    %cst_10 = arith.constant 0.000000e+00 : f32
    %35 = vector.broadcast %cst_10 : f32 to vector<8x32xf32>
    %36 = arith.maximumf %34, %35 : vector<8x32xf32>
    %c0_11 = arith.constant 0 : index
    %c0_12 = arith.constant 0 : index
    %37 = vector.load %arg6[%c0_11, %c0_12] : memref<32x4xf32, #tpu.memory_space<vmem>>, vector<32x4xf32>
    %cst_13 = arith.constant dense<0.000000e+00> : vector<8x4xf32>
    %38 = tpu.matmul %36, %37, %cst_13 {dimension_numbers = #tpu.dot_dimension_numbers<[1], [0], [0], [1], [0, 0, 1, 1], [], []>} : vector<8x32xf32>, vector<32x4xf32>, vector<8x4xf32> -> vector<8x4xf32>
    %c0_14 = arith.constant 0 : index
    %c0_15 = arith.constant 0 : index
    %39 = vector.load %arg7[%c0_14, %c0_15] : memref<1x4xf32, #tpu.memory_space<vmem>>, vector<1x4xf32>
    %40 = vector.broadcast %39 : vector<1x4xf32> to vector<8x4xf32>
    %41 = arith.addf %38, %40 : vector<8x4xf32>
    %c0_16 = arith.constant 0 : index
    %c0_17 = arith.constant 0 : index
    %42 = vector.load %arg8[%c0_16, %c0_17] : memref<8x4xf32, #tpu.memory_space<vmem>>, vector<8x4xf32>
    tpu.vector_store %arg8[%c0_16, %c0_17], %41 {strides = array<i32>} : memref<8x4xf32, #tpu.memory_space<vmem>>, vector<8x4xf32>,
    return
  }
  func.func @transform_0(%arg0: i32) -> (i32, i32) {
    %c0_i32 = arith.constant 0 : i32
    %c0_i32_0 = arith.constant 0 : i32
    return %arg0, %c0_i32 : i32, i32
  }
  func.func @transform_1(%arg0: i32) -> (i32, i32) {
    %c0_i32 = arith.constant 0 : i32
    %c0_i32_0 = arith.constant 0 : i32
    %c0_i32_1 = arith.constant 0 : i32
    return %c0_i32, %c0_i32_0 : i32, i32
  }
  func.func @transform_2(%arg0: i32) -> (i32, i32) {
    %c0_i32 = arith.constant 0 : i32
    %c0_i32_0 = arith.constant 0 : i32
    %c0_i32_1 = arith.constant 0 : i32
    return %c0_i32, %c0_i32_0 : i32, i32
  }
  func.func @transform_3(%arg0: i32) -> (i32, i32) {
    %c0_i32 = arith.constant 0 : i32
    %c0_i32_0 = arith.constant 0 : i32
    %c0_i32_1 = arith.constant 0 : i32
    return %c0_i32, %c0_i32_0 : i32, i32
  }
  func.func @transform_4(%arg0: i32) -> (i32, i32) {
    %c0_i32 = arith.constant 0 : i32
    %c0_i32_0 = arith.constant 0 : i32
    %c0_i32_1 = arith.constant 0 : i32
    return %c0_i32, %c0_i32_0 : i32, i32
  }
  func.func @transform_5(%arg0: i32) -> (i32, i32) {
    %c0_i32 = arith.constant 0 : i32
    %c0_i32_0 = arith.constant 0 : i32
    %c0_i32_1 = arith.constant 0 : i32
    return %c0_i32, %c0_i32_0 : i32, i32
  }
  func.func @transform_6(%arg0: i32) -> (i32, i32) {
    %c0_i32 = arith.constant 0 : i32
    %c0_i32_0 = arith.constant 0 : i32
    %c0_i32_1 = arith.constant 0 : i32
    return %c0_i32, %c0_i32_0 : i32, i32
  }
  func.func @transform_7(%arg0: i32) -> (i32, i32) {
    %c0_i32 = arith.constant 0 : i32
    %c0_i32_0 = arith.constant 0 : i32
    return %arg0, %c0_i32 : i32, i32
  }
}

</mosaic_0001>

<llo_original>
// kernel: tpu_custom_call.1
$region0: #{tpu_custom_call.1}
  #allocation0 [shape = 'u32[]', space=smem, size = 0x4, offset = 0x4, fixed_abs, tag = 'smem constant byte address 0x4 - core index']
  #allocation1 [shape = 'u32[72,128]{1,0:T(1,128)}', space=vmem, size = 0x9000, scoped, tag = 'internal scratch']
  %s0 = inlined_call_operand.vmem [shape: f32[8,4], index: 0, kind: input, shape index: {}]
  %s1 = inlined_call_operand.vmem [shape: f32[4,64], index: 1, kind: input, shape index: {}]
  %s2 = inlined_call_operand.vmem [shape: f32[1,64], index: 2, kind: input, shape index: {}]
  %s3 = inlined_call_operand.vmem [shape: f32[64,32], index: 3, kind: input, shape index: {}]
  %s4 = inlined_call_operand.vmem [shape: f32[1,32], index: 4, kind: input, shape index: {}]
  %s5 = inlined_call_operand.vmem [shape: f32[32,4], index: 5, kind: input, shape index: {}]
  %s6 = inlined_call_operand.vmem [shape: f32[1,4], index: 6, kind: input, shape index: {}]
  %s7 = inlined_call_operand.vmem [shape: f32[8,4], index: 7, kind: output, shape index: {}]
  %s8 = sld [smem:[#allocation0]]
  $region38: #{tpu_custom_call.1} parent=0
    _
  %s10 = ssub.s32 1, %s8
  %s11 = scalar_select 0, %s10, %s8
  // Predicated region
  $region2: #{tpu_custom_call.1} parent=0 // pred_check
    _
  $region3: #{tpu_custom_call.1} parent=0 // pred_check_branch
    %13 = sbr.rel (0) target = $region5
  $region4: #{tpu_custom_call.1} parent=0 // pred_region
    _
  $region5: #{tpu_custom_call.1} parent=0 // pred_fallthru
    _
  // Predicated region
  $region6: #{tpu_custom_call.1} parent=0 // pred_check
    _
  $region7: #{tpu_custom_call.1} parent=0 // pred_check_branch
    %15 = sbr.rel (0) target = $region9
  $region8: #{tpu_custom_call.1} parent=0 // pred_region
    _
  $region9: #{tpu_custom_call.1} parent=0 // pred_fallthru
    _
  // Predicated region
  $region10: #{tpu_custom_call.1} parent=0 // pred_check
    _
  $region11: #{tpu_custom_call.1} parent=0 // pred_check_branch
    %17 = sbr.rel (0) target = $region13
  $region12: #{tpu_custom_call.1} parent=0 // pred_region
    _
  $region13: #{tpu_custom_call.1} parent=0 // pred_fallthru
    _
  // Predicated region
  $region14: #{tpu_custom_call.1} parent=0 // pred_check
    _
  $region15: #{tpu_custom_call.1} parent=0 // pred_check_branch
    %19 = sbr.rel (0) target = $region17
  $region16: #{tpu_custom_call.1} parent=0 // pred_region
    _
  $region17: #{tpu_custom_call.1} parent=0 // pred_fallthru
    _
  // Predicated region
  $region18: #{tpu_custom_call.1} parent=0 // pred_check
    _
  $region19: #{tpu_custom_call.1} parent=0 // pred_check_branch
    %21 = sbr.rel (0) target = $region21
  $region20: #{tpu_custom_call.1} parent=0 // pred_region
    _
  $region21: #{tpu_custom_call.1} parent=0 // pred_fallthru
    _
  // Predicated region
  $region22: #{tpu_custom_call.1} parent=0 // pred_check
    _
  $region23: #{tpu_custom_call.1} parent=0 // pred_check_branch
    %23 = sbr.rel (0) target = $region25
  $region24: #{tpu_custom_call.1} parent=0 // pred_region
    _
  $region25: #{tpu_custom_call.1} parent=0 // pred_fallthru
    _
  // Predicated region
  $region26: #{tpu_custom_call.1} parent=0 // pred_check
    _
  $region27: #{tpu_custom_call.1} parent=0 // pred_check_branch
    %25 = sbr.rel (0) target = $region29
  $region28: #{tpu_custom_call.1} parent=0 // pred_region
    _
  $region29: #{tpu_custom_call.1} parent=0 // pred_fallthru
    _
  %v26 = vld [vmem:[%s0] sm:$0xff]
  %v27 = vld [vmem:[%s1] sm:$0xf]
  %v28 = vld [vmem:[%s2] sm:$0x1]
  %30 = vset.pattern.permute.xlu0 0
  %31 = vperm.xlu0 %30, %v26
  %v32 = vpop.permute.xlu0 %31
  %v34 = vperm.slane %v27, 0
  %v35 = vmul.f32 %v32, %v34
  %v37 = vperm.slane %v28, 0
  %v39 = vadd.f32 %v37, %v35
  %40 = vset.pattern.permute.xlu0 1
  %41 = vperm.xlu0 %40, %v26
  %v42 = vpop.permute.xlu0 %41
  %v44 = vperm.slane %v27, 1
  %v45 = vmul.f32 %v42, %v44
  %v46 = vadd.f32 %v39, %v45
  %47 = vset.pattern.permute.xlu0 2
  %48 = vperm.xlu0 %47, %v26
  %v49 = vpop.permute.xlu0 %48
  %v51 = vperm.slane %v27, 2
  %v52 = vmul.f32 %v49, %v51
  %v53 = vadd.f32 %v46, %v52
  %54 = vset.pattern.permute.xlu0 3
  %55 = vperm.xlu0 %54, %v26
  %v56 = vpop.permute.xlu0 %55
  %v58 = vperm.slane %v27, 3
  %v59 = vmul.f32 %v56, %v58
  %v60 = vadd.f32 %v53, %v59
  %v61 = vmax.f32 %v60, 0.0
  %v62 = vld [vmem:[%s3] sm:$0xff]
  %v63 = vld [vmem:[%s3 + $0x8] sm:$0xff]
  %v64 = vld [vmem:[%s3 + $0x10] sm:$0xff]
  %v65 = vld [vmem:[%s3 + $0x18] sm:$0xff]
  %v66 = vld [vmem:[%s3 + $0x20] sm:$0xff]
  %v67 = vld [vmem:[%s3 + $0x28] sm:$0xff]
  %v68 = vld [vmem:[%s3 + $0x30] sm:$0xff]
  %v69 = vld [vmem:[%s3 + $0x38] sm:$0xff]
  %v70 = vld [vmem:[%s4] sm:$0x1]
  %v72 = vperm.slane %v70, 0
  %vm74 = vcmask 523264
  %v76 = vsel %vm74, %v61, 0
  %78 = vmatpush.msra.mxu0 0.0
  %79 = vmatpush.msra.mxu0 0.0
  %80 = vmatpush.msra.mxu0 0.0
  %81 = vmatpush.msra.mxu0 0.0
  %82 = vmatpush.msra.mxu0 0.0
  %83 = vmatpush.msra.mxu0 0.0
  %84 = vmatpush.msra.mxu0 0.0
  %85 = vmatpush.msra.mxu0 0.0
  %86 = vmatpush.msra.mxu0 %v69
  %87 = vmatpush.msra.mxu0 %v68
  %88 = vmatpush.msra.mxu0 %v67
  %89 = vmatpush.msra.mxu0 %v66
  %90 = vmatpush.msra.mxu0 %v65
  %91 = vmatpush.msra.mxu0 %v64
  %92 = vmatpush.msra.mxu0 %v63
  %93 = vmatpush.msra.mxu0 %v62
  %94 = vmatmul.f32.gmra.mxu0 %v76
  %v95 = vpop.f32.mrf.mxu0
  %v96 = vadd.f32 %v72, %v95
  %97 = vdwg.mxu0
  %v98 = vmax.f32 %v96, 0.0
  %v99 = vld [vmem:[%s5] sm:$0xff]
  %v100 = vld [vmem:[%s5 + $0x8] sm:$0xff]
  %v101 = vld [vmem:[%s5 + $0x10] sm:$0xff]
  %v102 = vld [vmem:[%s5 + $0x18] sm:$0xff]
  %v103 = vld [vmem:[%s6] sm:$0x1]
  %v105 = vperm.slane %v103, 0
  %vm107 = vcmask 261120
  %v109 = vsel %vm107, %v98, 0
  %111 = vmatpush.msra.mxu0 0.0
  %112 = vmatpush.msra.mxu0 0.0
  %113 = vmatpush.msra.mxu0 0.0
  %114 = vmatpush.msra.mxu0 0.0
  %115 = vmatpush.msra.mxu0 0.0
  %116 = vmatpush.msra.mxu0 0.0
  %117 = vmatpush.msra.mxu0 0.0
  %118 = vmatpush.msra.mxu0 0.0
  %119 = vmatpush.msra.mxu0 0.0
  %120 = vmatpush.msra.mxu0 0.0
  %121 = vmatpush.msra.mxu0 0.0
  %122 = vmatpush.msra.mxu0 0.0
  %123 = vmatpush.msra.mxu0 %v102
  %124 = vmatpush.msra.mxu0 %v101
  %125 = vmatpush.msra.mxu0 %v100
  %126 = vmatpush.msra.mxu0 %v99
  %127 = vmatmul.f32.gmra.mxu0 %v109
  %v128 = vpop.f32.mrf.mxu0
  %v129 = vadd.f32 %v105, %v128
  %130 = vdwg.mxu0
  %vm131 = vcmask 31744
  %132 = vst.msk [vmem:[%s7] sm:$0xff] %vm131, %v129
  // Predicated region
  $region30: #{tpu_custom_call.1} parent=0 // pred_check
    _
  $region31: #{tpu_custom_call.1} parent=0 // pred_check_branch
    %134 = sbr.rel (0) target = $region33
  $region32: #{tpu_custom_call.1} parent=0 // pred_region
    _
  $region33: #{tpu_custom_call.1} parent=0 // pred_fallthru
    _
  // Predicated region
  $region34: #{tpu_custom_call.1} parent=0 // pred_check
    _
  $region35: #{tpu_custom_call.1} parent=0 // pred_check_branch
    %136 = sbr.rel (0) target = $region37
  $region36: #{tpu_custom_call.1} parent=0 // pred_region
    _
  $region37: #{tpu_custom_call.1} parent=0 // pred_fallthru
    _

</llo_original>
